<compile_context>
chip_gen: v7x
topology: tpu7x:2x2x1
jax: 0.10.0
libtpu: 0.0.40
codegen_flags: <defaults>
</compile_context>

<pallas_src>
import jax
import jax.numpy as jnp
from jax.experimental import pallas as pl
from jax.experimental.pallas import tpu as pltpu


def _round_up(x, m):
    return (x + m - 1) // m * m


def _fused_kernel(x_ref, w_ref, b_ref, o_ref):
    # Single MXU matmul (K = D_in, N = D_out), f32 accumulate, bias + ReLU on VPU.
    y = jnp.dot(x_ref[...], w_ref[...], preferred_element_type=jnp.float32)
    y = y + b_ref[...]
    o_ref[...] = jnp.maximum(y, 0.0).astype(o_ref.dtype)


def stnn_spnn_forward(x, w_st, b_st, w_sp, b_sp, *,
                      spnn_insize, stnn_insize, stnn_outsize, spnn_outsize,
                      tile_m=1024):
    """x: (B, N, SPNN_insize + STNN_insize) float32.

    Weights are stored (in, out) — i.e. transposed vs. torch nn.Linear — so the
    kernel computes x @ W + b (== torch x @ W.T + b).
    """
    B, N, D_in = x.shape
    assert D_in == spnn_insize + stnn_insize
    D_out = stnn_outsize + spnn_outsize
    M = B * N

    # Block-structured combined weight: one matmul computes both branches and
    # writes them already concatenated ([STNN_out | SPNN_out]).
    w_comb = jnp.zeros((D_in, D_out), dtype=x.dtype)
    w_comb = w_comb.at[spnn_insize:, :stnn_outsize].set(w_st.astype(x.dtype))
    w_comb = w_comb.at[:spnn_insize, stnn_outsize:].set(w_sp.astype(x.dtype))
    b_comb = jnp.concatenate([b_st, b_sp]).reshape(1, D_out).astype(x.dtype)

    x2d = x.reshape(M, D_in)

    # Row tiling. Pad M to a multiple of the tile so the trailing block never
    # mixes garbage into valid output rows; slice the padding off afterwards.
    tm = min(tile_m, _round_up(M, 8))
    m_pad = _round_up(M, tm)
    if m_pad != M:
        x2d = jnp.pad(x2d, ((0, m_pad - M), (0, 0)))

    grid = (m_pad // tm,)

    out2d = pl.pallas_call(
        _fused_kernel,
        out_shape=jax.ShapeDtypeStruct((m_pad, D_out), x.dtype),
        grid_spec=pltpu.PrefetchScalarGridSpec(
            num_scalar_prefetch=0,
            grid=grid,
            in_specs=[
                pl.BlockSpec((tm, D_in), lambda i: (i, 0)),        # x rows: tiled
                pl.BlockSpec((D_in, D_out), lambda i: (0, 0)),     # W_comb: resident
                pl.BlockSpec((1, D_out), lambda i: (0, 0)),        # b_comb: resident
            ],
            out_specs=pl.BlockSpec((tm, D_out), lambda i: (i, 0)),
        ),
        compiler_params=pltpu.CompilerParams(
            # Row axis has no cross-iteration dependence -> parallel (megacore
            # sharding on v7x; neutral on v5e/v6e).
            dimension_semantics=("parallel",),
            vmem_limit_bytes=32 << 20,
        ),
    )(x2d, w_comb, b_comb)

    return out2d[:M].reshape(B, N, D_out)


def reference_forward(x, w_st, b_st, w_sp, b_sp, *, spnn_insize):
    st_in = x[:, :, spnn_insize:]
    sp_in = x[:, :, :spnn_insize]
    st = jnp.maximum(jnp.einsum("bni,io->bno", st_in, w_st) + b_st, 0.0)
    sp = jnp.maximum(jnp.einsum("bni,io->bno", sp_in, w_sp) + b_sp, 0.0)
    return jnp.concatenate([st, sp], axis=-1)


if __name__ == "__main__":
    SPNN_insize, STNN_insize = 4, 6
    STNN_outsize, SPNN_outsize = 16, 8
    D_in = SPNN_insize + STNN_insize
    D_out = STNN_outsize + SPNN_outsize

    key = jax.random.PRNGKey(0)
    k1, k2, k3, k4, kx1, kx2 = jax.random.split(key, 6)

    # Deterministic parameter init (torch Linear default: U(-1/sqrt(in), 1/sqrt(in))),
    # stored as (in, out).
    def init_linear(kw, kb, insize, outsize):
        bound = 1.0 / jnp.sqrt(jnp.float32(insize))
        w = jax.random.uniform(kw, (insize, outsize), jnp.float32, -bound, bound)
        b = jax.random.uniform(kb, (outsize,), jnp.float32, -bound, bound)
        return w, b

    w_st, b_st = init_linear(k1, k2, STNN_insize, STNN_outsize)
    w_sp, b_sp = init_linear(k3, k4, SPNN_insize, SPNN_outsize)

    ok = True

    # Case 1: small shape from the module spec (single tile).
    B, N = 2, 8
    x = jax.random.normal(kx1, (B, N, D_in), dtype=jnp.float32)
    out = stnn_spnn_forward(
        x, w_st, b_st, w_sp, b_sp,
        spnn_insize=SPNN_insize, stnn_insize=STNN_insize,
        stnn_outsize=STNN_outsize, spnn_outsize=SPNN_outsize)
    out = jax.block_until_ready(out)
    ref = reference_forward(x, w_st, b_st, w_sp, b_sp, spnn_insize=SPNN_insize)
    ok &= out.shape == (B, N, D_out)
    ok &= bool(jnp.allclose(out, ref, atol=1e-5, rtol=1e-5))

    # Case 2: larger shape exercising multi-tile grid + trailing-block padding
    # (M = 2100 is not a multiple of TM = 1024).
    B2, N2 = 3, 700
    x2 = jax.random.normal(kx2, (B2, N2, D_in), dtype=jnp.float32)
    out2 = stnn_spnn_forward(
        x2, w_st, b_st, w_sp, b_sp,
        spnn_insize=SPNN_insize, stnn_insize=STNN_insize,
        stnn_outsize=STNN_outsize, spnn_outsize=SPNN_outsize)
    out2 = jax.block_until_ready(out2)
    ref2 = reference_forward(x2, w_st, b_st, w_sp, b_sp, spnn_insize=SPNN_insize)
    ok &= out2.shape == (B2, N2, D_out)
    ok &= bool(jnp.allclose(out2, ref2, atol=1e-5, rtol=1e-5))

    assert ok
    print("KERNEL_OK")
</pallas_src>

<mosaic_0001>
module attributes {stable_mosaic.version = 11 : i64} {
  func.func @_fused_kernel(%arg0: i32, %arg1: memref<16x10xf32, #tpu.memory_space<vmem>>, %arg2: memref<10x24xf32, #tpu.memory_space<vmem>>, %arg3: memref<1x24xf32, #tpu.memory_space<vmem>>, %arg4: memref<16x24xf32, #tpu.memory_space<vmem>>) attributes {dimension_semantics = [#tpu.dimension_semantics<parallel>], iteration_bounds = array<i64: 1>, scalar_prefetch = 0 : i64, scratch_operands = 0 : i64, tpu.core_type = #tpu.core_type<tc>, window_params = [{transform_indices = @transform_0, window_bounds = array<i64: 16, 10>}, {pipeline_mode = #tpu.pipeline_mode<synchronous>, transform_indices = @transform_1, window_bounds = array<i64: 10, 24>}, {pipeline_mode = #tpu.pipeline_mode<synchronous>, transform_indices = @transform_2, window_bounds = array<i64: 1, 24>}, {transform_indices = @transform_3, window_bounds = array<i64: 16, 24>}]} {
    %c0 = arith.constant 0 : index
    %c0_0 = arith.constant 0 : index
    %0 = vector.load %arg1[%c0, %c0_0] : memref<16x10xf32, #tpu.memory_space<vmem>>, vector<16x10xf32>
    %c0_1 = arith.constant 0 : index
    %c0_2 = arith.constant 0 : index
    %1 = vector.load %arg2[%c0_1, %c0_2] : memref<10x24xf32, #tpu.memory_space<vmem>>, vector<10x24xf32>
    %cst = arith.constant dense<0.000000e+00> : vector<16x24xf32>
    %2 = tpu.matmul %0, %1, %cst {dimension_numbers = #tpu.dot_dimension_numbers<[1], [0], [0], [1], [0, 0, 1, 1], [], []>} : vector<16x10xf32>, vector<10x24xf32>, vector<16x24xf32> -> vector<16x24xf32>
    %c0_3 = arith.constant 0 : index
    %c0_4 = arith.constant 0 : index
    %3 = vector.load %arg3[%c0_3, %c0_4] : memref<1x24xf32, #tpu.memory_space<vmem>>, vector<1x24xf32>
    %4 = vector.broadcast %3 : vector<1x24xf32> to vector<16x24xf32>
    %5 = arith.addf %2, %4 : vector<16x24xf32>
    %cst_5 = arith.constant 0.000000e+00 : f32
    %6 = vector.broadcast %cst_5 : f32 to vector<16x24xf32>
    %7 = arith.maximumf %5, %6 : vector<16x24xf32>
    %c0_6 = arith.constant 0 : index
    %c0_7 = arith.constant 0 : index
    %8 = vector.load %arg4[%c0_6, %c0_7] : memref<16x24xf32, #tpu.memory_space<vmem>>, vector<16x24xf32>
    tpu.vector_store %arg4[%c0_6, %c0_7], %7 {strides = array<i32>} : memref<16x24xf32, #tpu.memory_space<vmem>>, vector<16x24xf32>,
    return
  }
  func.func @transform_0(%arg0: i32) -> (i32, i32) {
    %c0_i32 = arith.constant 0 : i32
    %c0_i32_0 = arith.constant 0 : i32
    return %arg0, %c0_i32 : i32, i32
  }
  func.func @transform_1(%arg0: i32) -> (i32, i32) {
    %c0_i32 = arith.constant 0 : i32
    %c0_i32_0 = arith.constant 0 : i32
    %c0_i32_1 = arith.constant 0 : i32
    return %c0_i32, %c0_i32_0 : i32, i32
  }
  func.func @transform_2(%arg0: i32) -> (i32, i32) {
    %c0_i32 = arith.constant 0 : i32
    %c0_i32_0 = arith.constant 0 : i32
    %c0_i32_1 = arith.constant 0 : i32
    return %c0_i32, %c0_i32_0 : i32, i32
  }
  func.func @transform_3(%arg0: i32) -> (i32, i32) {
    %c0_i32 = arith.constant 0 : i32
    %c0_i32_0 = arith.constant 0 : i32
    return %arg0, %c0_i32 : i32, i32
  }
}

</mosaic_0001>

<llo_original>
// kernel: tpu_custom_call.1
$region0: #{tpu_custom_call.1}
  #allocation0 [shape = 'u32[]', space=smem, size = 0x4, offset = 0x4, fixed_abs, tag = 'smem constant byte address 0x4 - core index']
  #allocation1 [shape = 'u32[144,128]{1,0:T(1,128)}', space=vmem, size = 0x12000, scoped, tag = 'internal scratch']
  %s0 = inlined_call_operand.hbm [shape: f32[16,10], index: 0, kind: input, shape index: {}]
  %s1 = inlined_call_operand.hbm [shape: f32[10,24], index: 1, kind: input, shape index: {}]
  %s2 = inlined_call_operand.vmem [shape: f32[1,24], index: 2, kind: input, shape index: {}]
  %s3 = inlined_call_operand.hbm [shape: f32[16,24], index: 3, kind: output, shape index: {}]
  %s4 = sld [smem:[#allocation0]]
  $region30: #{tpu_custom_call.1} parent=0
    _
  %s6 = ssub.s32 1, %s4
  %s7 = scalar_select 0, %s6, %s4
  $region1: #{tpu_custom_call.1} parent=0
    #allocation2 [shape = 'u8[8192]{0}', space=vmem, size = 0x2000, scoped, tag = 'input window, operand 0, single buffered']
    #allocation3 [shape = 's32[1]{0}', space=sflag, size = 0x4, scoped, tag = 'scoped memory for tpu_custom_call.1']
    #allocation4 [shape = 's32[1]{0}', space=sflag, size = 0x4, scoped, tag = 'scoped memory for tpu_custom_call.1']
    #allocation5 [shape = 'u8[8192]{0}', space=vmem, size = 0x2000, scoped, tag = 'input window, operand 1, single buffered']
    #allocation6 [shape = 's32[1]{0}', space=sflag, size = 0x4, scoped, tag = 'scoped memory for tpu_custom_call.1']
    #allocation7 [shape = 'u8[8192]{0}', space=vmem, size = 0x2000, scoped, tag = 'output window, operand 0, single buffered']
    %8 = vsyncpa [#allocation3], 0
    %9 = vsyncpa [#allocation6], 0
    %10 = vsyncpa [#allocation4], 0
    // Predicated region
    $region2: #{tpu_custom_call.1} parent=1 // pred_check
      _
    $region3: #{tpu_custom_call.1} parent=1 // pred_check_branch
      %12 = sbr.rel (0) target = $region5
    $region4: #{tpu_custom_call.1} parent=1 // pred_region
      %s14 = ssub.s32 256, 256
      %15 = vsyncadd [#allocation3], %s14
      %s16 = sshll.u32 [#allocation2], 4
      %s17 = int_to_ptr.vmem [resolvable:$true] %s16
      %22 = dma.hbm_to_vmem [thread:$0]  %s0, 256, %s17, [#allocation3], 128, 128, 8
    $region5: #{tpu_custom_call.1} parent=1 // pred_fallthru
      _
    // Predicated region
    $region6: #{tpu_custom_call.1} parent=1 // pred_check
      _
    $region7: #{tpu_custom_call.1} parent=1 // pred_check_branch
      %24 = sbr.rel (0) target = $region9
    $region8: #{tpu_custom_call.1} parent=1 // pred_region
      %s26 = ssub.s32 256, 256
      %27 = vsyncadd [#allocation6], %s26
      %s28 = sshll.u32 [#allocation5], 4
      %s29 = int_to_ptr.vmem [resolvable:$true] %s28
      %34 = dma.hbm_to_vmem [thread:$0]  %s1, 256, %s29, [#allocation6], 128, 128, 8
    $region9: #{tpu_custom_call.1} parent=1 // pred_fallthru
      _
    // Predicated region
    $region10: #{tpu_custom_call.1} parent=1 // pred_check
      _
    $region11: #{tpu_custom_call.1} parent=1 // pred_check_branch
      %36 = sbr.rel (0) target = $region13
    $region12: #{tpu_custom_call.1} parent=1 // pred_region
      _
    $region13: #{tpu_custom_call.1} parent=1 // pred_fallthru
      _
    // Predicated region
    $region14: #{tpu_custom_call.1} parent=1 // pred_check
      _
    $region15: #{tpu_custom_call.1} parent=1 // pred_check_branch
      %38 = sbr.rel (0) target = $region17
    $region16: #{tpu_custom_call.1} parent=1 // pred_region
      %39 = dma.done [#allocation3], 256
    $region17: #{tpu_custom_call.1} parent=1 // pred_fallthru
      _
    // Predicated region
    $region18: #{tpu_custom_call.1} parent=1 // pred_check
      _
    $region19: #{tpu_custom_call.1} parent=1 // pred_check_branch
      %41 = sbr.rel (0) target = $region21
    $region20: #{tpu_custom_call.1} parent=1 // pred_region
      %42 = dma.done [#allocation6], 256
    $region21: #{tpu_custom_call.1} parent=1 // pred_fallthru
      _
    %v43 = vld [vmem:[#allocation2] sm:$0xff]
    %v44 = vld [vmem:[#allocation2 + $0x8] sm:$0xff]
    %v45 = vld [vmem:[#allocation5] sm:$0xff]
    %v46 = vld [vmem:[#allocation5 + $0x8] sm:$0x3]
    %v47 = vld [vmem:[%s2] sm:$0x1]
    %v49 = vlaneseq
    %v50 = vshrl.u32 %v49, 7
    %v51 = vsub.s32 0, %v50
    %v52 = vrot.slane %v47, %v51
    %vm54 = vcmask 80896
    %v56 = vsel %vm54, %v43, 0
    %v59 = vsel %vm54, %v44, 0
    %vm61 = vcmask 1041408
    %v63 = vsel %vm61, %v46, 0
    %65 = vmatprep.subr.mxu0 0.0
    %66 = vmatpush1.msra.mxu0 %v45
    %67 = vmatprep.subr.mxu0 0.0
    %68 = vmatpush1.msra.mxu0 %v63
    %69 = vmatprep.subr.mxu0 0.0
    %70 = vmatpush1.msra.mxu0 0.0
    %71 = vmatprep.subr.mxu0 0.0
    %72 = vmatpush1.msra.mxu0 0.0
    %73 = vmatprep.subr.mxu0 0.0
    %74 = vmatpush1.msra.mxu0 0.0
    %75 = vmatprep.subr.mxu0 0.0
    %76 = vmatpush1.msra.mxu0 0.0
    %77 = vmatprep.subr.mxu0 0.0
    %78 = vmatpush1.msra.mxu0 0.0
    %79 = vmatprep.subr.mxu0 0.0
    %80 = vmatpush1.msra.mxu0 0.0
    %81 = vmatprep.subr.mxu0 0.0
    %82 = vmatpush1.msra.mxu0 0.0
    %83 = vmatprep.subr.mxu0 0.0
    %84 = vmatpush1.msra.mxu0 0.0
    %85 = vmatprep.subr.mxu0 0.0
    %86 = vmatpush1.msra.mxu0 0.0
    %87 = vmatprep.subr.mxu0 0.0
    %88 = vmatpush1.msra.mxu0 0.0
    %89 = vmatprep.subr.mxu0 0.0
    %90 = vmatpush1.msra.mxu0 0.0
    %91 = vmatprep.subr.mxu0 0.0
    %92 = vmatpush1.msra.mxu0 0.0
    %93 = vmatprep.subr.mxu0 0.0
    %94 = vmatpush1.msra.mxu0 0.0
    %95 = vmatprep.subr.mxu0 0.0
    %96 = vmatpush1.msra.mxu0 0.0
    %97 = vmatprep.subr.mxu0 0.0
    %98 = vmatpush1.msra.mxu0 0.0
    %99 = vmatprep.subr.mxu0 0.0
    %100 = vmatpush1.msra.mxu0 0.0
    %101 = vmatprep.subr.mxu0 0.0
    %102 = vmatpush1.msra.mxu0 0.0
    %103 = vmatprep.subr.mxu0 0.0
    %104 = vmatpush1.msra.mxu0 0.0
    %105 = vmatprep.subr.mxu0 0.0
    %106 = vmatpush1.msra.mxu0 0.0
    %107 = vmatprep.subr.mxu0 0.0
    %108 = vmatpush1.msra.mxu0 0.0
    %109 = vmatprep.subr.mxu0 0.0
    %110 = vmatpush1.msra.mxu0 0.0
    %111 = vmatprep.subr.mxu0 0.0
    %112 = vmatpush1.msra.mxu0 0.0
    %113 = vmatprep.subr.mxu0 0.0
    %114 = vmatpush1.msra.mxu0 0.0
    %115 = vmatprep.subr.mxu0 0.0
    %116 = vmatpush1.msra.mxu0 0.0
    %117 = vmatprep.subr.mxu0 0.0
    %118 = vmatpush1.msra.mxu0 0.0
    %119 = vmatprep.subr.mxu0 0.0
    %120 = vmatpush1.msra.mxu0 0.0
    %121 = vmatprep.subr.mxu0 0.0
    %122 = vmatpush1.msra.mxu0 0.0
    %123 = vmatprep.subr.mxu0 0.0
    %124 = vmatpush1.msra.mxu0 0.0
    %125 = vmatprep.subr.mxu0 0.0
    %126 = vmatpush1.msra.mxu0 0.0
    %127 = vmatprep.subr.mxu0 0.0
    %128 = vmatpush1.msra.mxu0 0.0
    %129 = vmatprep.mubr.f32.mxu0 0.0
    %130 = vmatmul.mubr.f32.gmra.mrb[0].mxu0 %v56
    %v131 = vpop.f32.mrb[0].mxu0
    %v132 = vadd.f32 %v52, %v131
    %v133 = vpop.f32.mrb[0].mxu0
    %134 = vmatprep.mubr.f32.mxu0 0.0
    %135 = vmatmul.mubr.f32.gmra.mrb[0].mxu0 %v59
    %v136 = vpop.f32.mrb[0].mxu0
    %v137 = vadd.f32 %v52, %v136
    %v138 = vpop.f32.mrb[0].mxu0
    %139 = vdwg.mxu0
    %v140 = vmax.f32 %v132, 0.0
    %v141 = vmax.f32 %v137, 0.0
    %vm142 = vcmask 195584
    %143 = vst.msk [vmem:[#allocation7] sm:$0xff] %vm142, %v140
    %144 = vst.msk [vmem:[#allocation7 + $0x8] sm:$0xff] %vm142, %v141
    // Predicated region
    $region22: #{tpu_custom_call.1} parent=1 // pred_check
      _
    $region23: #{tpu_custom_call.1} parent=1 // pred_check_branch
      %146 = sbr.rel (0) target = $region25
    $region24: #{tpu_custom_call.1} parent=1 // pred_region
      %s148 = ssub.s32 256, 256
      %149 = vsyncadd [#allocation4], %s148
      %s150 = sshll.u32 [#allocation7], 4
      %s151 = int_to_ptr.vmem [resolvable:$true] %s150
      %156 = dma.vmem_to_hbm [thread:$0]  %s151, 256, %s3, [#allocation4], 128, 128, 8
    $region25: #{tpu_custom_call.1} parent=1 // pred_fallthru
      _
    // Predicated region
    $region26: #{tpu_custom_call.1} parent=1 // pred_check
      _
    $region27: #{tpu_custom_call.1} parent=1 // pred_check_branch
      %158 = sbr.rel (0) target = $region29
    $region28: #{tpu_custom_call.1} parent=1 // pred_region
      %159 = dma.done [#allocation4], 256
    $region29: #{tpu_custom_call.1} parent=1 // pred_fallthru
      _
    %160 = vsyncpa [#allocation3], 1
    %161 = vsyncpa [#allocation6], 1
    %162 = vsyncpa [#allocation4], 1

</llo_original>
